<compile_context>
chip_gen: v6e
topology: v6e:2x2x1
jax: 0.10.0
libtpu: 0.0.40
codegen_flags: <defaults>
</compile_context>

<pallas_src>
import jax
import jax.numpy as jnp
from jax.experimental import pallas as pl


# ----------------------------------------------------------------------------
# Fused Pallas kernel: whole GCAE forward in one invocation.
# ----------------------------------------------------------------------------
def _gcae_kernel(a_ref, x_ref,
                 ew1_ref, eb1_ref, ew2_ref, eb2_ref, efw_ref, efb_ref,
                 dw1_ref, db1_ref, dw2_ref, db2_ref, dfw_ref, dfb_ref,
                 o_ref):
    bf16 = jnp.bfloat16
    f32 = jnp.float32

    a = a_ref[...]                                       # [N, N] bf16

    def mm(lhs_bf16, rhs_bf16):
        # bf16 x bf16 -> f32 accumulation on the MXU.
        return jnp.dot(lhs_bf16, rhs_bf16, preferred_element_type=f32)

    def gcn(h_bf16, w_ref, b_ref, relu):
        # GCNConv:  A_hat @ (H W^T) + b
        xw = mm(h_bf16, w_ref[...])                      # [N, F_out] f32
        out = mm(a, xw.astype(bf16)) + b_ref[...]        # f32
        if relu:
            out = jnp.maximum(out, 0.0)
        return out

    def linear(h_bf16, w_ref, b_ref):
        return mm(h_bf16, w_ref[...]) + b_ref[...]       # f32

    # ---------------- Encoder ----------------
    h = gcn(x_ref[...], ew1_ref, eb1_ref, relu=True)     # [N, 2*out]
    h = gcn(h.astype(bf16), ew2_ref, eb2_ref, relu=False)  # [N, out]
    z = linear(h.astype(bf16), efw_ref, efb_ref)         # [N, out]
    # ---------------- Decoder ----------------
    h = gcn(z.astype(bf16), dw1_ref, db1_ref, relu=True)   # [N, 2*in]
    h = gcn(h.astype(bf16), dw2_ref, db2_ref, relu=False)  # [N, in]
    out = linear(h.astype(bf16), dfw_ref, dfb_ref)          # [N, 1024]

    o_ref[...] = out.astype(o_ref.dtype)


def _full_spec(shape):
    # Whole-array block (legal: block shape equals full array dims).
    return pl.BlockSpec(shape, lambda: (0,) * len(shape))


@jax.jit
def gcae_forward(params, x, a_hat):
    """Fused GCAE forward: single pallas_call, intermediates never hit HBM."""
    bf16 = jnp.bfloat16
    n = x.shape[0]
    f_out = params["dec_fcw"].shape[1]

    operands = [
        a_hat.astype(bf16),
        x.astype(bf16),
        params["enc_w1"].astype(bf16), params["enc_b1"].astype(jnp.float32),
        params["enc_w2"].astype(bf16), params["enc_b2"].astype(jnp.float32),
        params["enc_fcw"].astype(bf16), params["enc_fcb"].astype(jnp.float32),
        params["dec_w1"].astype(bf16), params["dec_b1"].astype(jnp.float32),
        params["dec_w2"].astype(bf16), params["dec_b2"].astype(jnp.float32),
        params["dec_fcw"].astype(bf16), params["dec_fcb"].astype(jnp.float32),
    ]

    return pl.pallas_call(
        _gcae_kernel,
        out_shape=jax.ShapeDtypeStruct((n, f_out), jnp.float32),
        in_specs=[_full_spec(op.shape) for op in operands],
        out_specs=_full_spec((n, f_out)),
    )(*operands)


# ----------------------------------------------------------------------------
# Graph normalization glue (plain JAX): dense D^-1/2 (A + I) D^-1/2.
# ----------------------------------------------------------------------------
def normalized_adjacency(edge_index, num_nodes):
    src, dst = edge_index[0], edge_index[1]
    a = jnp.zeros((num_nodes, num_nodes), jnp.float32)
    # aggregation at target (row dst) over sources (col src)
    a = a.at[dst, src].add(1.0)
    a = a + jnp.eye(num_nodes, dtype=jnp.float32)          # self loops
    deg = a.sum(axis=1)
    dinv = jnp.where(deg > 0.0, 1.0 / jnp.sqrt(deg), 0.0)
    return dinv[:, None] * a * dinv[None, :]


# ----------------------------------------------------------------------------
# GCAE parameters
# ----------------------------------------------------------------------------
def init_gcae_params(key, in_channels, out_channels):
    def dense(k, fan_in, fan_out):
        scale = jnp.sqrt(2.0 / (fan_in + fan_out))
        return jax.random.normal(k, (fan_in, fan_out), jnp.float32) * scale

    ks = jax.random.split(key, 8)
    p = {}
    # Encoder: GCNConv(in, 2*out), GCNConv(2*out, out), Linear(out, out)
    p["enc_w1"] = dense(ks[0], in_channels, 2 * out_channels)
    p["enc_b1"] = jnp.zeros((1, 2 * out_channels), jnp.float32)
    p["enc_w2"] = dense(ks[1], 2 * out_channels, out_channels)
    p["enc_b2"] = jnp.zeros((1, out_channels), jnp.float32)
    p["enc_fcw"] = dense(ks[2], out_channels, out_channels)
    p["enc_fcb"] = jax.random.normal(ks[3], (1, out_channels), jnp.float32) * 0.01
    # Decoder: GCNConv(out, 2*in), GCNConv(2*in, in), Linear(in, 1024)
    p["dec_w1"] = dense(ks[4], out_channels, 2 * in_channels)
    p["dec_b1"] = jnp.zeros((1, 2 * in_channels), jnp.float32)
    p["dec_w2"] = dense(ks[5], 2 * in_channels, in_channels)
    p["dec_b2"] = jnp.zeros((1, in_channels), jnp.float32)
    p["dec_fcw"] = dense(ks[6], in_channels, 1024)
    p["dec_fcb"] = jax.random.normal(ks[7], (1, 1024), jnp.float32) * 0.01
    return p


# ----------------------------------------------------------------------------
if __name__ == "__main__":
    N = 16            # number of graph nodes
    IN_CHANNELS = 8   # input node feature dim
    OUT_CHANNELS = 4  # latent dim

    key = jax.random.PRNGKey(0)
    kx, kp = jax.random.split(key)

    # node features [N, F_in]
    x = jax.random.normal(kx, (N, IN_CHANNELS), jnp.float32)

    # deterministic ring graph (symmetric edges), edge_index [2, E]
    src = jnp.concatenate([jnp.arange(N), (jnp.arange(N) + 1) % N])
    dst = jnp.concatenate([(jnp.arange(N) + 1) % N, jnp.arange(N)])
    edge_index = jnp.stack([src, dst], axis=0).astype(jnp.int32)

    a_hat = normalized_adjacency(edge_index, N)
    params = init_gcae_params(kp, IN_CHANNELS, OUT_CHANNELS)

    x_hat = gcae_forward(params, x, a_hat)
    jax.block_until_ready(x_hat)

    assert x_hat.shape == (N, 1024), x_hat.shape
    assert bool(jnp.all(jnp.isfinite(x_hat)))
    print("KERNEL_OK")
</pallas_src>

<mosaic_0001>
module attributes {stable_mosaic.version = 11 : i64} {
  func.func @_gcae_kernel(%arg0: memref<16x16xbf16, #tpu.memory_space<vmem>>, %arg1: memref<16x8xbf16, #tpu.memory_space<vmem>>, %arg2: memref<8x8xbf16, #tpu.memory_space<vmem>>, %arg3: memref<1x8xf32, #tpu.memory_space<vmem>>, %arg4: memref<8x4xbf16, #tpu.memory_space<vmem>>, %arg5: memref<1x4xf32, #tpu.memory_space<vmem>>, %arg6: memref<4x4xbf16, #tpu.memory_space<vmem>>, %arg7: memref<1x4xf32, #tpu.memory_space<vmem>>, %arg8: memref<4x16xbf16, #tpu.memory_space<vmem>>, %arg9: memref<1x16xf32, #tpu.memory_space<vmem>>, %arg10: memref<16x8xbf16, #tpu.memory_space<vmem>>, %arg11: memref<1x8xf32, #tpu.memory_space<vmem>>, %arg12: memref<8x1024xbf16, #tpu.memory_space<vmem>>, %arg13: memref<1x1024xf32, #tpu.memory_space<vmem>>, %arg14: memref<16x1024xf32, #tpu.memory_space<vmem>>) attributes {dimension_semantics = [], scalar_prefetch = 0 : i64, scratch_operands = 0 : i64, tpu.core_type = #tpu.core_type<tc>} {
    %c0 = arith.constant 0 : index
    %c0_0 = arith.constant 0 : index
    %0 = vector.load %arg0[%c0, %c0_0] : memref<16x16xbf16, #tpu.memory_space<vmem>>, vector<16x16xbf16>
    %c0_1 = arith.constant 0 : index
    %c0_2 = arith.constant 0 : index
    %1 = vector.load %arg1[%c0_1, %c0_2] : memref<16x8xbf16, #tpu.memory_space<vmem>>, vector<16x8xbf16>
    %c0_3 = arith.constant 0 : index
    %c0_4 = arith.constant 0 : index
    %2 = vector.load %arg2[%c0_3, %c0_4] : memref<8x8xbf16, #tpu.memory_space<vmem>>, vector<8x8xbf16>
    %cst = arith.constant dense<0.000000e+00> : vector<16x8xf32>
    %3 = tpu.matmul %1, %2, %cst {dimension_numbers = #tpu.dot_dimension_numbers<[1], [0], [0], [1], [0, 0, 1, 1], [], []>} : vector<16x8xbf16>, vector<8x8xbf16>, vector<16x8xf32> -> vector<16x8xf32>
    %4 = arith.truncf %3 : vector<16x8xf32> to vector<16x8xbf16>
    %cst_5 = arith.constant dense<0.000000e+00> : vector<16x8xf32>
    %5 = tpu.matmul %0, %4, %cst_5 {dimension_numbers = #tpu.dot_dimension_numbers<[1], [0], [0], [1], [0, 0, 1, 1], [], []>} : vector<16x16xbf16>, vector<16x8xbf16>, vector<16x8xf32> -> vector<16x8xf32>
    %c0_6 = arith.constant 0 : index
    %c0_7 = arith.constant 0 : index
    %6 = vector.load %arg3[%c0_6, %c0_7] : memref<1x8xf32, #tpu.memory_space<vmem>>, vector<1x8xf32>
    %7 = vector.broadcast %6 : vector<1x8xf32> to vector<16x8xf32>
    %8 = arith.addf %5, %7 : vector<16x8xf32>
    %cst_8 = arith.constant 0.000000e+00 : f32
    %9 = vector.broadcast %cst_8 : f32 to vector<16x8xf32>
    %10 = arith.maximumf %8, %9 : vector<16x8xf32>
    %11 = arith.truncf %10 : vector<16x8xf32> to vector<16x8xbf16>
    %c0_9 = arith.constant 0 : index
    %c0_10 = arith.constant 0 : index
    %12 = vector.load %arg4[%c0_9, %c0_10] : memref<8x4xbf16, #tpu.memory_space<vmem>>, vector<8x4xbf16>
    %cst_11 = arith.constant dense<0.000000e+00> : vector<16x4xf32>
    %13 = tpu.matmul %11, %12, %cst_11 {dimension_numbers = #tpu.dot_dimension_numbers<[1], [0], [0], [1], [0, 0, 1, 1], [], []>} : vector<16x8xbf16>, vector<8x4xbf16>, vector<16x4xf32> -> vector<16x4xf32>
    %14 = arith.truncf %13 : vector<16x4xf32> to vector<16x4xbf16>
    %cst_12 = arith.constant dense<0.000000e+00> : vector<16x4xf32>
    %15 = tpu.matmul %0, %14, %cst_12 {dimension_numbers = #tpu.dot_dimension_numbers<[1], [0], [0], [1], [0, 0, 1, 1], [], []>} : vector<16x16xbf16>, vector<16x4xbf16>, vector<16x4xf32> -> vector<16x4xf32>
    %c0_13 = arith.constant 0 : index
    %c0_14 = arith.constant 0 : index
    %16 = vector.load %arg5[%c0_13, %c0_14] : memref<1x4xf32, #tpu.memory_space<vmem>>, vector<1x4xf32>
    %17 = vector.broadcast %16 : vector<1x4xf32> to vector<16x4xf32>
    %18 = arith.addf %15, %17 : vector<16x4xf32>
    %19 = arith.truncf %18 : vector<16x4xf32> to vector<16x4xbf16>
    %c0_15 = arith.constant 0 : index
    %c0_16 = arith.constant 0 : index
    %20 = vector.load %arg6[%c0_15, %c0_16] : memref<4x4xbf16, #tpu.memory_space<vmem>>, vector<4x4xbf16>
    %cst_17 = arith.constant dense<0.000000e+00> : vector<16x4xf32>
    %21 = tpu.matmul %19, %20, %cst_17 {dimension_numbers = #tpu.dot_dimension_numbers<[1], [0], [0], [1], [0, 0, 1, 1], [], []>} : vector<16x4xbf16>, vector<4x4xbf16>, vector<16x4xf32> -> vector<16x4xf32>
    %c0_18 = arith.constant 0 : index
    %c0_19 = arith.constant 0 : index
    %22 = vector.load %arg7[%c0_18, %c0_19] : memref<1x4xf32, #tpu.memory_space<vmem>>, vector<1x4xf32>
    %23 = vector.broadcast %22 : vector<1x4xf32> to vector<16x4xf32>
    %24 = arith.addf %21, %23 : vector<16x4xf32>
    %25 = arith.truncf %24 : vector<16x4xf32> to vector<16x4xbf16>
    %c0_20 = arith.constant 0 : index
    %c0_21 = arith.constant 0 : index
    %26 = vector.load %arg8[%c0_20, %c0_21] : memref<4x16xbf16, #tpu.memory_space<vmem>>, vector<4x16xbf16>
    %cst_22 = arith.constant dense<0.000000e+00> : vector<16x16xf32>
    %27 = tpu.matmul %25, %26, %cst_22 {dimension_numbers = #tpu.dot_dimension_numbers<[1], [0], [0], [1], [0, 0, 1, 1], [], []>} : vector<16x4xbf16>, vector<4x16xbf16>, vector<16x16xf32> -> vector<16x16xf32>
    %28 = arith.truncf %27 : vector<16x16xf32> to vector<16x16xbf16>
    %cst_23 = arith.constant dense<0.000000e+00> : vector<16x16xf32>
    %29 = tpu.matmul %0, %28, %cst_23 {dimension_numbers = #tpu.dot_dimension_numbers<[1], [0], [0], [1], [0, 0, 1, 1], [], []>} : vector<16x16xbf16>, vector<16x16xbf16>, vector<16x16xf32> -> vector<16x16xf32>
    %c0_24 = arith.constant 0 : index
    %c0_25 = arith.constant 0 : index
    %30 = vector.load %arg9[%c0_24, %c0_25] : memref<1x16xf32, #tpu.memory_space<vmem>>, vector<1x16xf32>
    %31 = vector.broadcast %30 : vector<1x16xf32> to vector<16x16xf32>
    %32 = arith.addf %29, %31 : vector<16x16xf32>
    %cst_26 = arith.constant 0.000000e+00 : f32
    %33 = vector.broadcast %cst_26 : f32 to vector<16x16xf32>
    %34 = arith.maximumf %32, %33 : vector<16x16xf32>
    %35 = arith.truncf %34 : vector<16x16xf32> to vector<16x16xbf16>
    %c0_27 = arith.constant 0 : index
    %c0_28 = arith.constant 0 : index
    %36 = vector.load %arg10[%c0_27, %c0_28] : memref<16x8xbf16, #tpu.memory_space<vmem>>, vector<16x8xbf16>
    %cst_29 = arith.constant dense<0.000000e+00> : vector<16x8xf32>
    %37 = tpu.matmul %35, %36, %cst_29 {dimension_numbers = #tpu.dot_dimension_numbers<[1], [0], [0], [1], [0, 0, 1, 1], [], []>} : vector<16x16xbf16>, vector<16x8xbf16>, vector<16x8xf32> -> vector<16x8xf32>
    %38 = arith.truncf %37 : vector<16x8xf32> to vector<16x8xbf16>
    %cst_30 = arith.constant dense<0.000000e+00> : vector<16x8xf32>
    %39 = tpu.matmul %0, %38, %cst_30 {dimension_numbers = #tpu.dot_dimension_numbers<[1], [0], [0], [1], [0, 0, 1, 1], [], []>} : vector<16x16xbf16>, vector<16x8xbf16>, vector<16x8xf32> -> vector<16x8xf32>
    %c0_31 = arith.constant 0 : index
    %c0_32 = arith.constant 0 : index
    %40 = vector.load %arg11[%c0_31, %c0_32] : memref<1x8xf32, #tpu.memory_space<vmem>>, vector<1x8xf32>
    %41 = vector.broadcast %40 : vector<1x8xf32> to vector<16x8xf32>
    %42 = arith.addf %39, %41 : vector<16x8xf32>
    %43 = arith.truncf %42 : vector<16x8xf32> to vector<16x8xbf16>
    %c0_33 = arith.constant 0 : index
    %c0_34 = arith.constant 0 : index
    %44 = vector.load %arg12[%c0_33, %c0_34] : memref<8x1024xbf16, #tpu.memory_space<vmem>>, vector<8x1024xbf16>
    %cst_35 = arith.constant dense<0.000000e+00> : vector<16x1024xf32>
    %45 = tpu.matmul %43, %44, %cst_35 {dimension_numbers = #tpu.dot_dimension_numbers<[1], [0], [0], [1], [0, 0, 1, 1], [], []>} : vector<16x8xbf16>, vector<8x1024xbf16>, vector<16x1024xf32> -> vector<16x1024xf32>
    %c0_36 = arith.constant 0 : index
    %c0_37 = arith.constant 0 : index
    %46 = vector.load %arg13[%c0_36, %c0_37] : memref<1x1024xf32, #tpu.memory_space<vmem>>, vector<1x1024xf32>
    %47 = vector.broadcast %46 : vector<1x1024xf32> to vector<16x1024xf32>
    %48 = arith.addf %45, %47 : vector<16x1024xf32>
    %c0_38 = arith.constant 0 : index
    %c0_39 = arith.constant 0 : index
    %49 = vector.load %arg14[%c0_38, %c0_39] : memref<16x1024xf32, #tpu.memory_space<vmem>>, vector<16x1024xf32>
    tpu.vector_store %arg14[%c0_38, %c0_39], %48 {strides = array<i32>} : memref<16x1024xf32, #tpu.memory_space<vmem>>, vector<16x1024xf32>,
    return
  }
}

</mosaic_0001>

<llo_original>
// kernel: gcae_forward.1
$region0: #{gcae_forward.1}
  #allocation0 [shape = 'u32[]', space=smem, size = 0x4, offset = 0x4, fixed_abs, tag = 'smem constant byte address 0x4 - core index']
  #allocation1 [shape = 'u32[144,128]{1,0:T(1,128)}', space=vmem, size = 0x12000, scoped, tag = 'internal scratch']
  %s0 = inlined_call_operand.vmem [shape: bf16[16,16], index: 0, kind: input, shape index: {}]
  %s1 = inlined_call_operand.vmem [shape: bf16[16,8], index: 1, kind: input, shape index: {}]
  %s2 = inlined_call_operand.vmem [shape: bf16[8,8], index: 2, kind: input, shape index: {}]
  %s3 = inlined_call_operand.vmem [shape: f32[1,8], index: 3, kind: input, shape index: {}]
  %s4 = inlined_call_operand.vmem [shape: bf16[8,4], index: 4, kind: input, shape index: {}]
  %s5 = inlined_call_operand.vmem [shape: f32[1,4], index: 5, kind: input, shape index: {}]
  %s6 = inlined_call_operand.vmem [shape: bf16[4,4], index: 6, kind: input, shape index: {}]
  %s7 = inlined_call_operand.vmem [shape: f32[1,4], index: 7, kind: input, shape index: {}]
  %s8 = inlined_call_operand.vmem [shape: bf16[4,16], index: 8, kind: input, shape index: {}]
  %s9 = inlined_call_operand.vmem [shape: f32[1,16], index: 9, kind: input, shape index: {}]
  %s10 = inlined_call_operand.vmem [shape: bf16[16,8], index: 10, kind: input, shape index: {}]
  %s11 = inlined_call_operand.vmem [shape: f32[1,8], index: 11, kind: input, shape index: {}]
  %s12 = inlined_call_operand.vmem [shape: bf16[8,1024], index: 12, kind: input, shape index: {}]
  %s13 = inlined_call_operand.vmem [shape: f32[1,1024], index: 13, kind: input, shape index: {}]
  %s14 = inlined_call_operand.hbm [shape: f32[16,1024], index: 14, kind: output, shape index: {}]
  %s15 = sld [smem:[#allocation0]]
  $region66: #{gcae_forward.1} parent=0
    _
  %s17 = ssub.s32 1, %s15
  %s18 = scalar_select 0, %s17, %s15
  $region1: #{gcae_forward.1} parent=0
    #allocation2 [shape = 'u8[65536]{0}', space=vmem, size = 0x10000, scoped, tag = 'output window, operand 0, single buffered']
    #allocation3 [shape = 's32[1]{0}', space=sflag, size = 0x4, scoped, tag = 'scoped memory for gcae_forward.1']
    %19 = vsyncpa [#allocation3], 0
    // Predicated region
    $region2: #{gcae_forward.1} parent=1 // pred_check
      _
    $region3: #{gcae_forward.1} parent=1 // pred_check_branch
      %21 = sbr.rel (0) target = $region5
    $region4: #{gcae_forward.1} parent=1 // pred_region
      _
    $region5: #{gcae_forward.1} parent=1 // pred_fallthru
      _
    // Predicated region
    $region6: #{gcae_forward.1} parent=1 // pred_check
      _
    $region7: #{gcae_forward.1} parent=1 // pred_check_branch
      %23 = sbr.rel (0) target = $region9
    $region8: #{gcae_forward.1} parent=1 // pred_region
      _
    $region9: #{gcae_forward.1} parent=1 // pred_fallthru
      _
    // Predicated region
    $region10: #{gcae_forward.1} parent=1 // pred_check
      _
    $region11: #{gcae_forward.1} parent=1 // pred_check_branch
      %25 = sbr.rel (0) target = $region13
    $region12: #{gcae_forward.1} parent=1 // pred_region
      _
    $region13: #{gcae_forward.1} parent=1 // pred_fallthru
      _
    // Predicated region
    $region14: #{gcae_forward.1} parent=1 // pred_check
      _
    $region15: #{gcae_forward.1} parent=1 // pred_check_branch
      %27 = sbr.rel (0) target = $region17
    $region16: #{gcae_forward.1} parent=1 // pred_region
      _
    $region17: #{gcae_forward.1} parent=1 // pred_fallthru
      _
    // Predicated region
    $region18: #{gcae_forward.1} parent=1 // pred_check
      _
    $region19: #{gcae_forward.1} parent=1 // pred_check_branch
      %29 = sbr.rel (0) target = $region21
    $region20: #{gcae_forward.1} parent=1 // pred_region
      _
    $region21: #{gcae_forward.1} parent=1 // pred_fallthru
      _
    // Predicated region
    $region22: #{gcae_forward.1} parent=1 // pred_check
      _
    $region23: #{gcae_forward.1} parent=1 // pred_check_branch
      %31 = sbr.rel (0) target = $region25
    $region24: #{gcae_forward.1} parent=1 // pred_region
      _
    $region25: #{gcae_forward.1} parent=1 // pred_fallthru
      _
    // Predicated region
    $region26: #{gcae_forward.1} parent=1 // pred_check
      _
    $region27: #{gcae_forward.1} parent=1 // pred_check_branch
      %33 = sbr.rel (0) target = $region29
    $region28: #{gcae_forward.1} parent=1 // pred_region
      _
    $region29: #{gcae_forward.1} parent=1 // pred_fallthru
      _
    // Predicated region
    $region30: #{gcae_forward.1} parent=1 // pred_check
      _
    $region31: #{gcae_forward.1} parent=1 // pred_check_branch
      %35 = sbr.rel (0) target = $region33
    $region32: #{gcae_forward.1} parent=1 // pred_region
      _
    $region33: #{gcae_forward.1} parent=1 // pred_fallthru
      _
    // Predicated region
    $region34: #{gcae_forward.1} parent=1 // pred_check
      _
    $region35: #{gcae_forward.1} parent=1 // pred_check_branch
      %37 = sbr.rel (0) target = $region37
    $region36: #{gcae_forward.1} parent=1 // pred_region
      _
    $region37: #{gcae_forward.1} parent=1 // pred_fallthru
      _
    // Predicated region
    $region38: #{gcae_forward.1} parent=1 // pred_check
      _
    $region39: #{gcae_forward.1} parent=1 // pred_check_branch
      %39 = sbr.rel (0) target = $region41
    $region40: #{gcae_forward.1} parent=1 // pred_region
      _
    $region41: #{gcae_forward.1} parent=1 // pred_fallthru
      _
    // Predicated region
    $region42: #{gcae_forward.1} parent=1 // pred_check
      _
    $region43: #{gcae_forward.1} parent=1 // pred_check_branch
      %41 = sbr.rel (0) target = $region45
    $region44: #{gcae_forward.1} parent=1 // pred_region
      _
    $region45: #{gcae_forward.1} parent=1 // pred_fallthru
      _
    // Predicated region
    $region46: #{gcae_forward.1} parent=1 // pred_check
      _
    $region47: #{gcae_forward.1} parent=1 // pred_check_branch
      %43 = sbr.rel (0) target = $region49
    $region48: #{gcae_forward.1} parent=1 // pred_region
      _
    $region49: #{gcae_forward.1} parent=1 // pred_fallthru
      _
    // Predicated region
    $region50: #{gcae_forward.1} parent=1 // pred_check
      _
    $region51: #{gcae_forward.1} parent=1 // pred_check_branch
      %45 = sbr.rel (0) target = $region53
    $region52: #{gcae_forward.1} parent=1 // pred_region
      _
    $region53: #{gcae_forward.1} parent=1 // pred_fallthru
      _
    // Predicated region
    $region54: #{gcae_forward.1} parent=1 // pred_check
      _
    $region55: #{gcae_forward.1} parent=1 // pred_check_branch
      %47 = sbr.rel (0) target = $region57
    $region56: #{gcae_forward.1} parent=1 // pred_region
      _
    $region57: #{gcae_forward.1} parent=1 // pred_fallthru
      _
    %v49 = vld [vmem:[%s0] sm:$0xf]
    %v50 = vld [vmem:[%s0 + $0x4] sm:$0xf]
    %v51 = vld [vmem:[%s1] sm:$0xf]
    %v52 = vld [vmem:[%s1 + $0x4] sm:$0xf]
    %v53 = vld [vmem:[%s2] sm:$0xf]
    %v56 = vunpack.c.l.b16 %v51
    %v57 = vunpack.c.l.b16 %v52
    %v58 = vpack.c.b16 %v57, %v56
    %vm59 = vcmask 64512
    %v61 = vsel %vm59, %v58, 0
    %vm63 = vcmask 1043456
    %v65 = vsel %vm63, %v53, 0
    %67 = vmatprep.subr.bf16.mxu0 0
    %68 = vmatpush1.bf16.msra.mxu0 0
    %69 = vmatprep.subr.bf16.mxu0 0
    %70 = vmatpush1.bf16.msra.mxu0 0
    %71 = vmatprep.subr.bf16.mxu0 0
    %72 = vmatpush1.bf16.msra.mxu0 0
    %73 = vmatprep.subr.bf16.mxu0 0
    %74 = vmatpush1.bf16.msra.mxu0 0
    %75 = vmatprep.subr.bf16.mxu0 0
    %76 = vmatpush1.bf16.msra.mxu0 0
    %77 = vmatprep.subr.bf16.mxu0 0
    %78 = vmatpush1.bf16.msra.mxu0 0
    %79 = vmatprep.subr.bf16.mxu0 0
    %80 = vmatpush1.bf16.msra.mxu0 0
    %81 = vmatprep.subr.bf16.mxu0 0
    %82 = vmatpush1.bf16.msra.mxu0 %v65
    %83 = vmatprep.subr.bf16.mxu0 0
    %84 = vmatpush2.bf16.msra.mxu0 0
    %85 = vmatprep.subr.bf16.mxu0 0
    %86 = vmatpush2.bf16.msra.mxu0 0
    %87 = vmatprep.subr.bf16.mxu0 0
    %88 = vmatpush2.bf16.msra.mxu0 0
    %89 = vmatprep.subr.bf16.mxu0 0
    %90 = vmatpush2.bf16.msra.mxu0 0
    %91 = vmatprep.subr.bf16.mxu0 0
    %92 = vmatpush2.bf16.msra.mxu0 0
    %93 = vmatprep.subr.bf16.mxu0 0
    %94 = vmatpush2.bf16.msra.mxu0 0
    %95 = vmatprep.subr.bf16.mxu0 0
    %96 = vmatpush2.bf16.msra.mxu0 0
    %97 = vmatprep.subr.bf16.mxu0 0
    %98 = vmatpush2.bf16.msra.mxu0 0
    %99 = vmatprep.mubr.bf16.mxu0 0
    %100 = vmatmul.mubr.bf16.gmra.mxu0 %v61
    %v101 = vpop.f32.mrf.mxu0
    %v102 = vadd.f32 0.0, %v101
    %v103 = vpop.f32.mrf.mxu0
    %v104 = vpop.f32.mrf.mxu0
    %v105 = vadd.f32 0.0, %v104
    %v106 = vpop.f32.mrf.mxu0
    %107 = vdwg.mxu0
    %v108 = vpack.c.bf16 %v105, %v102
    %v109 = vld [vmem:[%s3] sm:$0x1]
    %v111 = vlaneseq
    %v112 = vshrl.u32 %v111, 7
    %v113 = vsub.s32 0, %v112
    %v114 = vrot.slane %v109, %v113
    %v118 = vunpack.c.l.b16 %v49
    %v119 = vunpack.c.l.b16 %v50
    %v120 = vpack.c.b16 %v119, %v118
    %vm121 = vcmask 130048
    %v123 = vsel %vm121, %v120, 0
    %125 = vmatprep.subr.bf16.mxu0 0
    %126 = vmatpush1.bf16.msra.mxu0 0
    %127 = vmatprep.subr.bf16.mxu0 0
    %128 = vmatpush1.bf16.msra.mxu0 0
    %129 = vmatprep.subr.bf16.mxu0 0
    %130 = vmatpush1.bf16.msra.mxu0 0
    %131 = vmatprep.subr.bf16.mxu0 0
    %132 = vmatpush1.bf16.msra.mxu0 0
    %133 = vmatprep.subr.bf16.mxu0 0
    %134 = vmatpush1.bf16.msra.mxu0 0
    %135 = vmatprep.subr.bf16.mxu0 0
    %136 = vmatpush1.bf16.msra.mxu0 0
    %137 = vmatprep.subr.bf16.mxu0 0
    %138 = vmatpush1.bf16.msra.mxu0 0
    %139 = vmatprep.subr.bf16.mxu0 0
    %140 = vmatpush1.bf16.msra.mxu0 %v108
    %141 = vmatprep.subr.bf16.mxu0 0
    %142 = vmatpush2.bf16.msra.mxu0 0
    %143 = vmatprep.subr.bf16.mxu0 0
    %144 = vmatpush2.bf16.msra.mxu0 0
    %145 = vmatprep.subr.bf16.mxu0 0
    %146 = vmatpush2.bf16.msra.mxu0 0
    %147 = vmatprep.subr.bf16.mxu0 0
    %148 = vmatpush2.bf16.msra.mxu0 0
    %149 = vmatprep.subr.bf16.mxu0 0
    %150 = vmatpush2.bf16.msra.mxu0 0
    %151 = vmatprep.subr.bf16.mxu0 0
    %152 = vmatpush2.bf16.msra.mxu0 0
    %153 = vmatprep.subr.bf16.mxu0 0
    %154 = vmatpush2.bf16.msra.mxu0 0
    %155 = vmatprep.subr.bf16.mxu0 0
    %156 = vmatpush2.bf16.msra.mxu0 0
    %157 = vmatprep.mubr.bf16.mxu0 0
    %158 = vmatmul.mubr.bf16.gmra.mxu0 %v123
    %v159 = vpop.f32.mrf.mxu0
    %v160 = vadd.f32 %v114, %v159
    %v161 = vpop.f32.mrf.mxu0
    %v162 = vpop.f32.mrf.mxu0
    %v163 = vadd.f32 %v114, %v162
    %v164 = vpop.f32.mrf.mxu0
    %165 = vdwg.mxu0
    %v166 = vmax.f32 %v160, 0.0
    %v167 = vmax.f32 %v163, 0.0
    %v168 = vpack.c.bf16 %v167, %v166
    %v169 = vld [vmem:[%s4] sm:$0xf]
    %v171 = vsel %vm59, %v168, 0
    %v174 = vsel %vm63, %v169, 0
    %176 = vmatprep.subr.bf16.mxu0 0
    %177 = vmatpush1.bf16.msra.mxu0 0
    %178 = vmatprep.subr.bf16.mxu0 0
    %179 = vmatpush1.bf16.msra.mxu0 0
    %180 = vmatprep.subr.bf16.mxu0 0
    %181 = vmatpush1.bf16.msra.mxu0 0
    %182 = vmatprep.subr.bf16.mxu0 0
    %183 = vmatpush1.bf16.msra.mxu0 0
    %184 = vmatprep.subr.bf16.mxu0 0
    %185 = vmatpush1.bf16.msra.mxu0 0
    %186 = vmatprep.subr.bf16.mxu0 0
    %187 = vmatpush1.bf16.msra.mxu0 0
    %188 = vmatprep.subr.bf16.mxu0 0
    %189 = vmatpush1.bf16.msra.mxu0 0
    %190 = vmatprep.subr.bf16.mxu0 0
    %191 = vmatpush1.bf16.msra.mxu0 %v174
    %192 = vmatprep.subr.bf16.mxu0 0
    %193 = vmatpush2.bf16.msra.mxu0 0
    %194 = vmatprep.subr.bf16.mxu0 0
    %195 = vmatpush2.bf16.msra.mxu0 0
    %196 = vmatprep.subr.bf16.mxu0 0
    %197 = vmatpush2.bf16.msra.mxu0 0
    %198 = vmatprep.subr.bf16.mxu0 0
    %199 = vmatpush2.bf16.msra.mxu0 0
    %200 = vmatprep.subr.bf16.mxu0 0
    %201 = vmatpush2.bf16.msra.mxu0 0
    %202 = vmatprep.subr.bf16.mxu0 0
    %203 = vmatpush2.bf16.msra.mxu0 0
    %204 = vmatprep.subr.bf16.mxu0 0
    %205 = vmatpush2.bf16.msra.mxu0 0
    %206 = vmatprep.subr.bf16.mxu0 0
    %207 = vmatpush2.bf16.msra.mxu0 0
    %208 = vmatprep.mubr.bf16.mxu0 0
    %209 = vmatmul.mubr.bf16.gmra.mxu0 %v171
    %v210 = vpop.f32.mrf.mxu0
    %v211 = vadd.f32 0.0, %v210
    %v212 = vpop.f32.mrf.mxu0
    %v213 = vpop.f32.mrf.mxu0
    %v214 = vadd.f32 0.0, %v213
    %v215 = vpop.f32.mrf.mxu0
    %216 = vdwg.mxu0
    %v217 = vpack.c.bf16 %v214, %v211
    %v218 = vld [vmem:[%s5] sm:$0x1]
    %v220 = vlaneseq
    %v221 = vshrl.u32 %v220, 7
    %v222 = vsub.s32 0, %v221
    %v223 = vrot.slane %v218, %v222
    %225 = vmatprep.subr.bf16.mxu0 0
    %226 = vmatpush1.bf16.msra.mxu0 0
    %227 = vmatprep.subr.bf16.mxu0 0
    %228 = vmatpush1.bf16.msra.mxu0 0
    %229 = vmatprep.subr.bf16.mxu0 0
    %230 = vmatpush1.bf16.msra.mxu0 0
    %231 = vmatprep.subr.bf16.mxu0 0
    %232 = vmatpush1.bf16.msra.mxu0 0
    %233 = vmatprep.subr.bf16.mxu0 0
    %234 = vmatpush1.bf16.msra.mxu0 0
    %235 = vmatprep.subr.bf16.mxu0 0
    %236 = vmatpush1.bf16.msra.mxu0 0
    %237 = vmatprep.subr.bf16.mxu0 0
    %238 = vmatpush1.bf16.msra.mxu0 0
    %239 = vmatprep.subr.bf16.mxu0 0
    %240 = vmatpush1.bf16.msra.mxu0 %v217
    %241 = vmatprep.subr.bf16.mxu0 0
    %242 = vmatpush2.bf16.msra.mxu0 0
    %243 = vmatprep.subr.bf16.mxu0 0
    %244 = vmatpush2.bf16.msra.mxu0 0
    %245 = vmatprep.subr.bf16.mxu0 0
    %246 = vmatpush2.bf16.msra.mxu0 0
    %247 = vmatprep.subr.bf16.mxu0 0
    %248 = vmatpush2.bf16.msra.mxu0 0
    %249 = vmatprep.subr.bf16.mxu0 0
    %250 = vmatpush2.bf16.msra.mxu0 0
    %251 = vmatprep.subr.bf16.mxu0 0
    %252 = vmatpush2.bf16.msra.mxu0 0
    %253 = vmatprep.subr.bf16.mxu0 0
    %254 = vmatpush2.bf16.msra.mxu0 0
    %255 = vmatprep.subr.bf16.mxu0 0
    %256 = vmatpush2.bf16.msra.mxu0 0
    %257 = vmatprep.mubr.bf16.mxu0 0
    %258 = vmatmul.mubr.bf16.gmra.mxu0 %v123
    %v259 = vpop.f32.mrf.mxu0
    %v260 = vadd.f32 %v223, %v259
    %v261 = vpop.f32.mrf.mxu0
    %v262 = vpop.f32.mrf.mxu0
    %v263 = vadd.f32 %v223, %v262
    %v264 = vpop.f32.mrf.mxu0
    %265 = vdwg.mxu0
    %v266 = vpack.c.bf16 %v263, %v260
    %v267 = vld [vmem:[%s6] sm:$0x3]
    %v268 = vld [vmem:[%s7] sm:$0x1]
    %v270 = vlaneseq
    %v271 = vshrl.u32 %v270, 7
    %v272 = vsub.s32 0, %v271
    %v273 = vrot.slane %v268, %v272
    %vm275 = vcmask 31744
    %v277 = vsel %vm275, %v266, 0
    %vm279 = vcmask 1041408
    %v281 = vsel %vm279, %v267, 0
    %283 = vmatprep.subr.bf16.mxu0 0
    %284 = vmatpush1.bf16.msra.mxu0 0
    %285 = vmatprep.subr.bf16.mxu0 0
    %286 = vmatpush1.bf16.msra.mxu0 0
    %287 = vmatprep.subr.bf16.mxu0 0
    %288 = vmatpush1.bf16.msra.mxu0 0
    %289 = vmatprep.subr.bf16.mxu0 0
    %290 = vmatpush1.bf16.msra.mxu0 0
    %291 = vmatprep.subr.bf16.mxu0 0
    %292 = vmatpush1.bf16.msra.mxu0 0
    %293 = vmatprep.subr.bf16.mxu0 0
    %294 = vmatpush1.bf16.msra.mxu0 0
    %295 = vmatprep.subr.bf16.mxu0 0
    %296 = vmatpush1.bf16.msra.mxu0 0
    %297 = vmatprep.subr.bf16.mxu0 0
    %298 = vmatpush1.bf16.msra.mxu0 %v281
    %299 = vmatprep.subr.bf16.mxu0 0
    %300 = vmatpush2.bf16.msra.mxu0 0
    %301 = vmatprep.subr.bf16.mxu0 0
    %302 = vmatpush2.bf16.msra.mxu0 0
    %303 = vmatprep.subr.bf16.mxu0 0
    %304 = vmatpush2.bf16.msra.mxu0 0
    %305 = vmatprep.subr.bf16.mxu0 0
    %306 = vmatpush2.bf16.msra.mxu0 0
    %307 = vmatprep.subr.bf16.mxu0 0
    %308 = vmatpush2.bf16.msra.mxu0 0
    %309 = vmatprep.subr.bf16.mxu0 0
    %310 = vmatpush2.bf16.msra.mxu0 0
    %311 = vmatprep.subr.bf16.mxu0 0
    %312 = vmatpush2.bf16.msra.mxu0 0
    %313 = vmatprep.subr.bf16.mxu0 0
    %314 = vmatpush2.bf16.msra.mxu0 0
    %315 = vmatprep.mubr.bf16.mxu0 0
    %316 = vmatmul.mubr.bf16.gmra.mxu0 %v277
    %v317 = vpop.f32.mrf.mxu0
    %v318 = vadd.f32 %v273, %v317
    %v319 = vpop.f32.mrf.mxu0
    %v320 = vpop.f32.mrf.mxu0
    %v321 = vadd.f32 %v273, %v320
    %v322 = vpop.f32.mrf.mxu0
    %323 = vdwg.mxu0
    %v324 = vpack.c.bf16 %v321, %v318
    %v325 = vld [vmem:[%s8] sm:$0x3]
    %v327 = vsel %vm275, %v324, 0
    %v330 = vsel %vm279, %v325, 0
    %332 = vmatprep.subr.bf16.mxu0 0
    %333 = vmatpush1.bf16.msra.mxu0 0
    %334 = vmatprep.subr.bf16.mxu0 0
    %335 = vmatpush1.bf16.msra.mxu0 0
    %336 = vmatprep.subr.bf16.mxu0 0
    %337 = vmatpush1.bf16.msra.mxu0 0
    %338 = vmatprep.subr.bf16.mxu0 0
    %339 = vmatpush1.bf16.msra.mxu0 0
    %340 = vmatprep.subr.bf16.mxu0 0
    %341 = vmatpush1.bf16.msra.mxu0 0
    %342 = vmatprep.subr.bf16.mxu0 0
    %343 = vmatpush1.bf16.msra.mxu0 0
    %344 = vmatprep.subr.bf16.mxu0 0
    %345 = vmatpush1.bf16.msra.mxu0 0
    %346 = vmatprep.subr.bf16.mxu0 0
    %347 = vmatpush1.bf16.msra.mxu0 %v330
    %348 = vmatprep.subr.bf16.mxu0 0
    %349 = vmatpush2.bf16.msra.mxu0 0
    %350 = vmatprep.subr.bf16.mxu0 0
    %351 = vmatpush2.bf16.msra.mxu0 0
    %352 = vmatprep.subr.bf16.mxu0 0
    %353 = vmatpush2.bf16.msra.mxu0 0
    %354 = vmatprep.subr.bf16.mxu0 0
    %355 = vmatpush2.bf16.msra.mxu0 0
    %356 = vmatprep.subr.bf16.mxu0 0
    %357 = vmatpush2.bf16.msra.mxu0 0
    %358 = vmatprep.subr.bf16.mxu0 0
    %359 = vmatpush2.bf16.msra.mxu0 0
    %360 = vmatprep.subr.bf16.mxu0 0
    %361 = vmatpush2.bf16.msra.mxu0 0
    %362 = vmatprep.subr.bf16.mxu0 0
    %363 = vmatpush2.bf16.msra.mxu0 0
    %364 = vmatprep.mubr.bf16.mxu0 0
    %365 = vmatmul.mubr.bf16.gmra.mxu0 %v327
    %v366 = vpop.f32.mrf.mxu0
    %v367 = vadd.f32 0.0, %v366
    %v368 = vpop.f32.mrf.mxu0
    %v369 = vpop.f32.mrf.mxu0
    %v370 = vadd.f32 0.0, %v369
    %v371 = vpop.f32.mrf.mxu0
    %372 = vdwg.mxu0
    %v373 = vpack.c.bf16 %v370, %v367
    %v374 = vld [vmem:[%s9] sm:$0x1]
    %v376 = vlaneseq
    %v377 = vshrl.u32 %v376, 7
    %v378 = vsub.s32 0, %v377
    %v379 = vrot.slane %v374, %v378
    %381 = vmatprep.subr.bf16.mxu0 0
    %382 = vmatpush1.bf16.msra.mxu0 0
    %383 = vmatprep.subr.bf16.mxu0 0
    %384 = vmatpush1.bf16.msra.mxu0 0
    %385 = vmatprep.subr.bf16.mxu0 0
    %386 = vmatpush1.bf16.msra.mxu0 0
    %387 = vmatprep.subr.bf16.mxu0 0
    %388 = vmatpush1.bf16.msra.mxu0 0
    %389 = vmatprep.subr.bf16.mxu0 0
    %390 = vmatpush1.bf16.msra.mxu0 0
    %391 = vmatprep.subr.bf16.mxu0 0
    %392 = vmatpush1.bf16.msra.mxu0 0
    %393 = vmatprep.subr.bf16.mxu0 0
    %394 = vmatpush1.bf16.msra.mxu0 0
    %395 = vmatprep.subr.bf16.mxu0 0
    %396 = vmatpush1.bf16.msra.mxu0 %v373
    %397 = vmatprep.subr.bf16.mxu0 0
    %398 = vmatpush2.bf16.msra.mxu0 0
    %399 = vmatprep.subr.bf16.mxu0 0
    %400 = vmatpush2.bf16.msra.mxu0 0
    %401 = vmatprep.subr.bf16.mxu0 0
    %402 = vmatpush2.bf16.msra.mxu0 0
    %403 = vmatprep.subr.bf16.mxu0 0
    %404 = vmatpush2.bf16.msra.mxu0 0
    %405 = vmatprep.subr.bf16.mxu0 0
    %406 = vmatpush2.bf16.msra.mxu0 0
    %407 = vmatprep.subr.bf16.mxu0 0
    %408 = vmatpush2.bf16.msra.mxu0 0
    %409 = vmatprep.subr.bf16.mxu0 0
    %410 = vmatpush2.bf16.msra.mxu0 0
    %411 = vmatprep.subr.bf16.mxu0 0
    %412 = vmatpush2.bf16.msra.mxu0 0
    %413 = vmatprep.mubr.bf16.mxu0 0
    %414 = vmatmul.mubr.bf16.gmra.mxu0 %v123
    %v415 = vpop.f32.mrf.mxu0
    %v416 = vadd.f32 %v379, %v415
    %v417 = vpop.f32.mrf.mxu0
    %v418 = vpop.f32.mrf.mxu0
    %v419 = vadd.f32 %v379, %v418
    %v420 = vpop.f32.mrf.mxu0
    %421 = vdwg.mxu0
    %v422 = vmax.f32 %v416, 0.0
    %v423 = vmax.f32 %v419, 0.0
    %v424 = vpack.c.bf16 %v423, %v422
    %v425 = vld [vmem:[%s10] sm:$0xf]
    %v426 = vld [vmem:[%s10 + $0x4] sm:$0xf]
    %v429 = vunpack.c.l.b16 %v425
    %v430 = vunpack.c.l.b16 %v426
    %v431 = vpack.c.b16 %v430, %v429
    %v434 = vsel %vm121, %v424, 0
    %436 = vmatprep.subr.bf16.mxu0 0
    %437 = vmatpush1.bf16.msra.mxu0 0
    %438 = vmatprep.subr.bf16.mxu0 0
    %439 = vmatpush1.bf16.msra.mxu0 0
    %440 = vmatprep.subr.bf16.mxu0 0
    %441 = vmatpush1.bf16.msra.mxu0 0
    %442 = vmatprep.subr.bf16.mxu0 0
    %443 = vmatpush1.bf16.msra.mxu0 0
    %444 = vmatprep.subr.bf16.mxu0 0
    %445 = vmatpush1.bf16.msra.mxu0 0
    %446 = vmatprep.subr.bf16.mxu0 0
    %447 = vmatpush1.bf16.msra.mxu0 0
    %448 = vmatprep.subr.bf16.mxu0 0
    %449 = vmatpush1.bf16.msra.mxu0 0
    %450 = vmatprep.subr.bf16.mxu0 0
    %451 = vmatpush1.bf16.msra.mxu0 %v431
    %452 = vmatprep.subr.bf16.mxu0 0
    %453 = vmatpush2.bf16.msra.mxu0 0
    %454 = vmatprep.subr.bf16.mxu0 0
    %455 = vmatpush2.bf16.msra.mxu0 0
    %456 = vmatprep.subr.bf16.mxu0 0
    %457 = vmatpush2.bf16.msra.mxu0 0
    %458 = vmatprep.subr.bf16.mxu0 0
    %459 = vmatpush2.bf16.msra.mxu0 0
    %460 = vmatprep.subr.bf16.mxu0 0
    %461 = vmatpush2.bf16.msra.mxu0 0
    %462 = vmatprep.subr.bf16.mxu0 0
    %463 = vmatpush2.bf16.msra.mxu0 0
    %464 = vmatprep.subr.bf16.mxu0 0
    %465 = vmatpush2.bf16.msra.mxu0 0
    %466 = vmatprep.subr.bf16.mxu0 0
    %467 = vmatpush2.bf16.msra.mxu0 0
    %468 = vmatprep.mubr.bf16.mxu0 0
    %469 = vmatmul.mubr.bf16.gmra.mxu0 %v434
    %v470 = vpop.f32.mrf.mxu0
    %v471 = vadd.f32 0.0, %v470
    %v472 = vpop.f32.mrf.mxu0
    %v473 = vpop.f32.mrf.mxu0
    %v474 = vadd.f32 0.0, %v473
    %v475 = vpop.f32.mrf.mxu0
    %476 = vdwg.mxu0
    %v477 = vpack.c.bf16 %v474, %v471
    %v478 = vld [vmem:[%s11] sm:$0x1]
    %v480 = vlaneseq
    %v481 = vshrl.u32 %v480, 7
    %v482 = vsub.s32 0, %v481
    %v483 = vrot.slane %v478, %v482
    %485 = vmatprep.subr.bf16.mxu0 0
    %486 = vmatpush1.bf16.msra.mxu0 0
    %487 = vmatprep.subr.bf16.mxu0 0
    %488 = vmatpush1.bf16.msra.mxu0 0
    %489 = vmatprep.subr.bf16.mxu0 0
    %490 = vmatpush1.bf16.msra.mxu0 0
    %491 = vmatprep.subr.bf16.mxu0 0
    %492 = vmatpush1.bf16.msra.mxu0 0
    %493 = vmatprep.subr.bf16.mxu0 0
    %494 = vmatpush1.bf16.msra.mxu0 0
    %495 = vmatprep.subr.bf16.mxu0 0
    %496 = vmatpush1.bf16.msra.mxu0 0
    %497 = vmatprep.subr.bf16.mxu0 0
    %498 = vmatpush1.bf16.msra.mxu0 0
    %499 = vmatprep.subr.bf16.mxu0 0
    %500 = vmatpush1.bf16.msra.mxu0 %v477
    %501 = vmatprep.subr.bf16.mxu0 0
    %502 = vmatpush2.bf16.msra.mxu0 0
    %503 = vmatprep.subr.bf16.mxu0 0
    %504 = vmatpush2.bf16.msra.mxu0 0
    %505 = vmatprep.subr.bf16.mxu0 0
    %506 = vmatpush2.bf16.msra.mxu0 0
    %507 = vmatprep.subr.bf16.mxu0 0
    %508 = vmatpush2.bf16.msra.mxu0 0
    %509 = vmatprep.subr.bf16.mxu0 0
    %510 = vmatpush2.bf16.msra.mxu0 0
    %511 = vmatprep.subr.bf16.mxu0 0
    %512 = vmatpush2.bf16.msra.mxu0 0
    %513 = vmatprep.subr.bf16.mxu0 0
    %514 = vmatpush2.bf16.msra.mxu0 0
    %515 = vmatprep.subr.bf16.mxu0 0
    %516 = vmatpush2.bf16.msra.mxu0 0
    %517 = vmatprep.mubr.bf16.mxu0 0
    %518 = vmatmul.mubr.bf16.gmra.mxu0 %v123
    %v519 = vpop.f32.mrf.mxu0
    %v520 = vadd.f32 %v483, %v519
    %v521 = vpop.f32.mrf.mxu0
    %v522 = vpop.f32.mrf.mxu0
    %v523 = vadd.f32 %v483, %v522
    %v524 = vpop.f32.mrf.mxu0
    %525 = vdwg.mxu0
    %v526 = vpack.c.bf16 %v523, %v520
    %v527 = vld [vmem:[%s12] sm:$0xff]
    %v528 = vld [vmem:[%s12 + $0x8] sm:$0xff]
    %v529 = vld [vmem:[%s12 + $0x10] sm:$0xff]
    %v530 = vld [vmem:[%s12 + $0x18] sm:$0xff]
    %v531 = vld [vmem:[%s13] sm:$0xff]
    %v533 = vlaneseq
    %v534 = vshrl.u32 %v533, 7
    %v535 = vsub.s32 0, %v534
    %v536 = vrot.slane %v531, %v535
    %v537 = vlaneseq
    %v538 = vshrl.u32 %v537, 7
    %v539 = vsub.s32 1, %v538
    %v540 = vrot.slane %v531, %v539
    %v541 = vlaneseq
    %v542 = vshrl.u32 %v541, 7
    %v543 = vsub.s32 2, %v542
    %v544 = vrot.slane %v531, %v543
    %v545 = vlaneseq
    %v546 = vshrl.u32 %v545, 7
    %v547 = vsub.s32 3, %v546
    %v548 = vrot.slane %v531, %v547
    %v549 = vlaneseq
    %v550 = vshrl.u32 %v549, 7
    %v551 = vsub.s32 4, %v550
    %v552 = vrot.slane %v531, %v551
    %v553 = vlaneseq
    %v554 = vshrl.u32 %v553, 7
    %v555 = vsub.s32 5, %v554
    %v556 = vrot.slane %v531, %v555
    %v557 = vlaneseq
    %v558 = vshrl.u32 %v557, 7
    %v559 = vsub.s32 6, %v558
    %v560 = vrot.slane %v531, %v559
    %v561 = vlaneseq
    %v562 = vshrl.u32 %v561, 7
    %v563 = vsub.s32 7, %v562
    %v564 = vrot.slane %v531, %v563
    %v577 = vunpack.c.l.b16 %v527
    %v578 = vunpack.c.h.b16 %v527
    %v579 = vunpack.c.l.b16 %v528
    %v580 = vunpack.c.h.b16 %v528
    %v581 = vunpack.c.l.b16 %v529
    %v582 = vunpack.c.h.b16 %v529
    %v583 = vunpack.c.l.b16 %v530
    %v584 = vunpack.c.h.b16 %v530
    %v585 = vpack.c.b16 %v577, %v577
    %v586 = vpack.c.b16 %v578, %v578
    %v587 = vpack.c.b16 %v579, %v579
    %v588 = vpack.c.b16 %v580, %v580
    %v589 = vpack.c.b16 %v581, %v581
    %v590 = vpack.c.b16 %v582, %v582
    %v591 = vpack.c.b16 %v583, %v583
    %v592 = vpack.c.b16 %v584, %v584
    %v594 = vsel %vm59, %v526, 0
    %v597 = vsel %vm63, %v585, 0
    %v600 = vsel %vm63, %v586, 0
    %v603 = vsel %vm63, %v587, 0
    %v606 = vsel %vm63, %v588, 0
    %v609 = vsel %vm63, %v589, 0
    %v612 = vsel %vm63, %v590, 0
    %v615 = vsel %vm63, %v591, 0
    %v618 = vsel %vm63, %v592, 0
    %620 = vmatprep.subr.bf16.mxu0 0
    %621 = vmatpush1.bf16.msra.mxu0 0
    %622 = vmatprep.subr.bf16.mxu0 0
    %623 = vmatpush1.bf16.msra.mxu0 0
    %624 = vmatprep.subr.bf16.mxu0 0
    %625 = vmatpush1.bf16.msra.mxu0 0
    %626 = vmatprep.subr.bf16.mxu0 0
    %627 = vmatpush1.bf16.msra.mxu0 0
    %628 = vmatprep.subr.bf16.mxu0 0
    %629 = vmatpush1.bf16.msra.mxu0 0
    %630 = vmatprep.subr.bf16.mxu0 0
    %631 = vmatpush1.bf16.msra.mxu0 0
    %632 = vmatprep.subr.bf16.mxu0 0
    %633 = vmatpush1.bf16.msra.mxu0 0
    %634 = vmatprep.subr.bf16.mxu0 %v600
    %635 = vmatpush1.bf16.msra.mxu0 %v597
    %636 = vmatprep.subr.bf16.mxu0 0
    %637 = vmatpush2.bf16.msra.mxu0 0
    %638 = vmatprep.subr.bf16.mxu0 0
    %639 = vmatpush2.bf16.msra.mxu0 0
    %640 = vmatprep.subr.bf16.mxu0 0
    %641 = vmatpush2.bf16.msra.mxu0 0
    %642 = vmatprep.subr.bf16.mxu0 0
    %643 = vmatpush2.bf16.msra.mxu0 0
    %644 = vmatprep.subr.bf16.mxu0 0
    %645 = vmatpush2.bf16.msra.mxu0 0
    %646 = vmatprep.subr.bf16.mxu0 0
    %647 = vmatpush2.bf16.msra.mxu0 0
    %648 = vmatprep.subr.bf16.mxu0 0
    %649 = vmatpush2.bf16.msra.mxu0 0
    %650 = vmatprep.subr.bf16.mxu0 0
    %651 = vmatpush2.bf16.msra.mxu0 0
    %652 = vmatprep.mubr.bf16.mxu0 0
    %653 = vmatmul.mubr.bf16.gmra.mxu0 %v594
    %v654 = vpop.f32.mrf.mxu0
    %v655 = vadd.f32 %v536, %v654
    %v656 = vpop.f32.mrf.mxu0
    %v657 = vadd.f32 %v540, %v656
    %v658 = vpop.f32.mrf.mxu0
    %v659 = vadd.f32 %v536, %v658
    %v660 = vpop.f32.mrf.mxu0
    %v661 = vadd.f32 %v540, %v660
    %662 = vdwg.mxu0
    %663 = vmatprep.subr.bf16.mxu0 0
    %664 = vmatpush1.bf16.msra.mxu0 0
    %665 = vmatprep.subr.bf16.mxu0 0
    %666 = vmatpush1.bf16.msra.mxu0 0
    %667 = vmatprep.subr.bf16.mxu0 0
    %668 = vmatpush1.bf16.msra.mxu0 0
    %669 = vmatprep.subr.bf16.mxu0 0
    %670 = vmatpush1.bf16.msra.mxu0 0
    %671 = vmatprep.subr.bf16.mxu0 0
    %672 = vmatpush1.bf16.msra.mxu0 0
    %673 = vmatprep.subr.bf16.mxu0 0
    %674 = vmatpush1.bf16.msra.mxu0 0
    %675 = vmatprep.subr.bf16.mxu0 0
    %676 = vmatpush1.bf16.msra.mxu0 0
    %677 = vmatprep.subr.bf16.mxu0 %v606
    %678 = vmatpush1.bf16.msra.mxu0 %v603
    %679 = vmatprep.subr.bf16.mxu0 0
    %680 = vmatpush2.bf16.msra.mxu0 0
    %681 = vmatprep.subr.bf16.mxu0 0
    %682 = vmatpush2.bf16.msra.mxu0 0
    %683 = vmatprep.subr.bf16.mxu0 0
    %684 = vmatpush2.bf16.msra.mxu0 0
    %685 = vmatprep.subr.bf16.mxu0 0
    %686 = vmatpush2.bf16.msra.mxu0 0
    %687 = vmatprep.subr.bf16.mxu0 0
    %688 = vmatpush2.bf16.msra.mxu0 0
    %689 = vmatprep.subr.bf16.mxu0 0
    %690 = vmatpush2.bf16.msra.mxu0 0
    %691 = vmatprep.subr.bf16.mxu0 0
    %692 = vmatpush2.bf16.msra.mxu0 0
    %693 = vmatprep.subr.bf16.mxu0 0
    %694 = vmatpush2.bf16.msra.mxu0 0
    %695 = vmatprep.mubr.bf16.mxu0 0
    %696 = vmatmul.mubr.bf16.gmra.mxu0 %v594
    %v697 = vpop.f32.mrf.mxu0
    %v698 = vadd.f32 %v544, %v697
    %v699 = vpop.f32.mrf.mxu0
    %v700 = vadd.f32 %v548, %v699
    %v701 = vpop.f32.mrf.mxu0
    %v702 = vadd.f32 %v544, %v701
    %v703 = vpop.f32.mrf.mxu0
    %v704 = vadd.f32 %v548, %v703
    %705 = vdwg.mxu0
    %706 = vmatprep.subr.bf16.mxu0 0
    %707 = vmatpush1.bf16.msra.mxu0 0
    %708 = vmatprep.subr.bf16.mxu0 0
    %709 = vmatpush1.bf16.msra.mxu0 0
    %710 = vmatprep.subr.bf16.mxu0 0
    %711 = vmatpush1.bf16.msra.mxu0 0
    %712 = vmatprep.subr.bf16.mxu0 0
    %713 = vmatpush1.bf16.msra.mxu0 0
    %714 = vmatprep.subr.bf16.mxu0 0
    %715 = vmatpush1.bf16.msra.mxu0 0
    %716 = vmatprep.subr.bf16.mxu0 0
    %717 = vmatpush1.bf16.msra.mxu0 0
    %718 = vmatprep.subr.bf16.mxu0 0
    %719 = vmatpush1.bf16.msra.mxu0 0
    %720 = vmatprep.subr.bf16.mxu0 %v612
    %721 = vmatpush1.bf16.msra.mxu0 %v609
    %722 = vmatprep.subr.bf16.mxu0 0
    %723 = vmatpush2.bf16.msra.mxu0 0
    %724 = vmatprep.subr.bf16.mxu0 0
    %725 = vmatpush2.bf16.msra.mxu0 0
    %726 = vmatprep.subr.bf16.mxu0 0
    %727 = vmatpush2.bf16.msra.mxu0 0
    %728 = vmatprep.subr.bf16.mxu0 0
    %729 = vmatpush2.bf16.msra.mxu0 0
    %730 = vmatprep.subr.bf16.mxu0 0
    %731 = vmatpush2.bf16.msra.mxu0 0
    %732 = vmatprep.subr.bf16.mxu0 0
    %733 = vmatpush2.bf16.msra.mxu0 0
    %734 = vmatprep.subr.bf16.mxu0 0
    %735 = vmatpush2.bf16.msra.mxu0 0
    %736 = vmatprep.subr.bf16.mxu0 0
    %737 = vmatpush2.bf16.msra.mxu0 0
    %738 = vmatprep.mubr.bf16.mxu0 0
    %739 = vmatmul.mubr.bf16.gmra.mxu0 %v594
    %v740 = vpop.f32.mrf.mxu0
    %v741 = vadd.f32 %v552, %v740
    %v742 = vpop.f32.mrf.mxu0
    %v743 = vadd.f32 %v556, %v742
    %v744 = vpop.f32.mrf.mxu0
    %v745 = vadd.f32 %v552, %v744
    %v746 = vpop.f32.mrf.mxu0
    %v747 = vadd.f32 %v556, %v746
    %748 = vdwg.mxu0
    %749 = vmatprep.subr.bf16.mxu0 0
    %750 = vmatpush1.bf16.msra.mxu0 0
    %751 = vmatprep.subr.bf16.mxu0 0
    %752 = vmatpush1.bf16.msra.mxu0 0
    %753 = vmatprep.subr.bf16.mxu0 0
    %754 = vmatpush1.bf16.msra.mxu0 0
    %755 = vmatprep.subr.bf16.mxu0 0
    %756 = vmatpush1.bf16.msra.mxu0 0
    %757 = vmatprep.subr.bf16.mxu0 0
    %758 = vmatpush1.bf16.msra.mxu0 0
    %759 = vmatprep.subr.bf16.mxu0 0
    %760 = vmatpush1.bf16.msra.mxu0 0
    %761 = vmatprep.subr.bf16.mxu0 0
    %762 = vmatpush1.bf16.msra.mxu0 0
    %763 = vmatprep.subr.bf16.mxu0 %v618
    %764 = vmatpush1.bf16.msra.mxu0 %v615
    %765 = vmatprep.subr.bf16.mxu0 0
    %766 = vmatpush2.bf16.msra.mxu0 0
    %767 = vmatprep.subr.bf16.mxu0 0
    %768 = vmatpush2.bf16.msra.mxu0 0
    %769 = vmatprep.subr.bf16.mxu0 0
    %770 = vmatpush2.bf16.msra.mxu0 0
    %771 = vmatprep.subr.bf16.mxu0 0
    %772 = vmatpush2.bf16.msra.mxu0 0
    %773 = vmatprep.subr.bf16.mxu0 0
    %774 = vmatpush2.bf16.msra.mxu0 0
    %775 = vmatprep.subr.bf16.mxu0 0
    %776 = vmatpush2.bf16.msra.mxu0 0
    %777 = vmatprep.subr.bf16.mxu0 0
    %778 = vmatpush2.bf16.msra.mxu0 0
    %779 = vmatprep.subr.bf16.mxu0 0
    %780 = vmatpush2.bf16.msra.mxu0 0
    %781 = vmatprep.mubr.bf16.mxu0 0
    %782 = vmatmul.mubr.bf16.gmra.mxu0 %v594
    %v783 = vpop.f32.mrf.mxu0
    %v784 = vadd.f32 %v560, %v783
    %v785 = vpop.f32.mrf.mxu0
    %v786 = vadd.f32 %v564, %v785
    %v787 = vpop.f32.mrf.mxu0
    %v788 = vadd.f32 %v560, %v787
    %v789 = vpop.f32.mrf.mxu0
    %v790 = vadd.f32 %v564, %v789
    %791 = vdwg.mxu0
    %792 = vst [vmem:[#allocation2] sm:$0xff] %v655
    %793 = vst [vmem:[#allocation2 + $0x8] sm:$0xff] %v657
    %794 = vst [vmem:[#allocation2 + $0x10] sm:$0xff] %v698
    %795 = vst [vmem:[#allocation2 + $0x18] sm:$0xff] %v700
    %796 = vst [vmem:[#allocation2 + $0x20] sm:$0xff] %v741
    %797 = vst [vmem:[#allocation2 + $0x28] sm:$0xff] %v743
    %798 = vst [vmem:[#allocation2 + $0x30] sm:$0xff] %v784
    %799 = vst [vmem:[#allocation2 + $0x38] sm:$0xff] %v786
    %800 = vst [vmem:[#allocation2 + $0x40] sm:$0xff] %v659
    %801 = vst [vmem:[#allocation2 + $0x48] sm:$0xff] %v661
    %802 = vst [vmem:[#allocation2 + $0x50] sm:$0xff] %v702
    %803 = vst [vmem:[#allocation2 + $0x58] sm:$0xff] %v704
    %804 = vst [vmem:[#allocation2 + $0x60] sm:$0xff] %v745
    %805 = vst [vmem:[#allocation2 + $0x68] sm:$0xff] %v747
    %806 = vst [vmem:[#allocation2 + $0x70] sm:$0xff] %v788
    %807 = vst [vmem:[#allocation2 + $0x78] sm:$0xff] %v790
    // Predicated region
    $region58: #{gcae_forward.1} parent=1 // pred_check
      _
    $region59: #{gcae_forward.1} parent=1 // pred_check_branch
      %809 = sbr.rel (0) target = $region61
    $region60: #{gcae_forward.1} parent=1 // pred_region
      %s811 = ssub.s32 2048, 2048
      %812 = vsyncadd [#allocation3], %s811
      %s813 = sshll.u32 [#allocation2], 4
      %s814 = int_to_ptr.vmem [resolvable:$true] %s813
      %819 = dma.vmem_to_hbm [thread:$0]  %s814, 2048, %s14, [#allocation3], 1024, 1024, 64
    $region61: #{gcae_forward.1} parent=1 // pred_fallthru
      _
    // Predicated region
    $region62: #{gcae_forward.1} parent=1 // pred_check
      _
    $region63: #{gcae_forward.1} parent=1 // pred_check_branch
      %821 = sbr.rel (0) target = $region65
    $region64: #{gcae_forward.1} parent=1 // pred_region
      %822 = dma.done [#allocation3], 2048
    $region65: #{gcae_forward.1} parent=1 // pred_fallthru
      _
    %823 = vsyncpa [#allocation3], 1

</llo_original>
